<compile_context>
chip_gen: v5e
topology: v5e:2x2
jax: 0.10.0
libtpu: 0.0.40
codegen_flags: <defaults>
</compile_context>

<pallas_src>
import jax
import jax.numpy as jnp
from jax import lax
from jax.experimental import pallas as pl
from jax.experimental.pallas import tpu as pltpu

_EPS = 1e-12                      # torch.nn.functional.normalize default eps
_VMEM_LIMIT = 48 * 1024 * 1024    # requested scoped VMEM (fits every TPU gen)
_TILE_BUDGET = 12 * 1024 * 1024   # one input tile; x2 double-buffered << limit


# ----------------------------- in-kernel helpers ----------------------------

def _row_normalize(x):
    """F.normalize(x, p=2, dim=1): x / max(||x||_2, eps), via rsqrt on the EUP."""
    sumsq = jnp.sum(x * x, axis=1, keepdims=True)
    return x * lax.rsqrt(jnp.maximum(sumsq, jnp.float32(_EPS * _EPS)))


def _gram_rownorm(a):
    """normalize(a @ a.T, dim=1) (contract last dims; no explicit transpose)."""
    g = lax.dot_general(a, a, (((1,), (1,)), ((), ())),
                        preferred_element_type=jnp.float32)
    return _row_normalize(g)


def _plain_sim(f):
    """Similarity matrix of logits (is_at=False path). f: (B, K) -> (B, B)."""
    return _gram_rownorm(_row_normalize(f))


# ------------------- stage 1: channel-pooled sum of squares ------------------

def _pool_sumsq_kernel(x_ref, o_ref):
    """Accumulate sum_c f^2 over channel tiles into a resident (1, B, S) block."""
    c = pl.program_id(1)
    x = x_ref[...].astype(jnp.float32)          # native dtype tile -> f32 in-reg
    part = jnp.sum(x * x, axis=1)               # (B, S) sublane/XLU reduce

    @pl.when(c == 0)
    def _init():
        o_ref[0] = part

    @pl.when(c > 0)
    def _acc():
        o_ref[0] = o_ref[0] + part


def _choose_c_tile(B, C, S, itemsize):
    """Largest aligned channel tile whose double-buffered block fits the budget."""
    sub = 8 if itemsize >= 4 else (16 if itemsize == 2 else 32)
    max_tc = (_TILE_BUDGET // (B * S * itemsize)) // sub * sub
    max_tc = max(sub, max_tc)
    return C if C <= max_tc else max_tc


def _pooled_sumsq(f):
    """Per-feature-map gridded kernel: (B, C, *spatial) -> (P, B, S) partial sums."""
    B, C = f.shape[0], f.shape[1]
    x = f.reshape(B, C, -1)                     # NATIVE dtype: no f32 pre-cast
    S = x.shape[2]
    itemsize = jnp.dtype(x.dtype).itemsize

    tc = _choose_c_tile(B, C, S, itemsize)
    nblk = pl.cdiv(C, tc)
    c_pad = nblk * tc
    if c_pad != C:                              # zero channels add 0 to sum(f^2)
        x = jnp.pad(x, ((0, 0), (0, c_pad - C), (0, 0)))

    # Megacore (v7x): split the channel reduction across both TensorCores when
    # there are at least two channel tiles; v5e/v6e just run the axis serially.
    P = 2 if (nblk >= 2 and nblk % 2 == 0) else 1
    ct = nblk // P

    cost = pl.CostEstimate(
        flops=2 * B * c_pad * S,
        transcendentals=0,
        bytes_accessed=B * c_pad * S * itemsize + P * B * S * 4)

    return pl.pallas_call(
        _pool_sumsq_kernel,
        out_shape=jax.ShapeDtypeStruct((P, B, S), jnp.float32),
        grid=(P, ct),
        in_specs=[pl.BlockSpec((B, tc, S), lambda p, c: (0, p * ct + c, 0))],
        out_specs=pl.BlockSpec((1, B, S), lambda p, c: (p, 0, 0)),
        compiler_params=pltpu.CompilerParams(
            dimension_semantics=("parallel", "arbitrary"),
            vmem_limit_bytes=_VMEM_LIMIT),
        cost_estimate=cost,
    )(x)
    # TODO(synk): for S (=H*W) so large that a (B, S) f32 block itself blows the
    # VMEM budget, add a second grid axis over S tiles as well.


# --------------------- stage 2: similarity matrices + loss -------------------

def _make_loss_kernel(s_nl, t_n_feat):
    """Fused loss kernel for a fixed (static) number of layers."""
    t_nl = t_n_feat + 1

    def kernel(*refs):
        s_pool = refs[:s_nl]
        t_pool = refs[s_nl:s_nl + t_n_feat]
        s_l_ref, t_l_ref, out_ref = refs[s_nl + t_n_feat:]
        B = s_l_ref.shape[0]

        def sim_from_pool(ref):
            a = jnp.sum(ref[...], axis=0)        # combine per-core partial sums
            return _gram_rownorm(_row_normalize(a))

        s_l_mtx = _plain_sim(s_l_ref[...].astype(jnp.float32))
        t_l_mtx = _plain_sim(t_l_ref[...].astype(jnp.float32))
        s_mats = [sim_from_pool(r) for r in s_pool]
        t_mats = [sim_from_pool(r) for r in t_pool] + [t_l_mtx]

        dl = s_l_mtx - t_l_mtx
        l_loss = jnp.sum(dl * dl) * (1.0 / (B * B))

        # sum_ij ||S_i - T_j||^2 = t_nl*sum||S||^2 + s_nl*sum||T||^2 - 2<sumS,sumT>
        s_sum, s_sq = s_mats[0], jnp.sum(s_mats[0] * s_mats[0])
        for m in s_mats[1:]:
            s_sum = s_sum + m
            s_sq = s_sq + jnp.sum(m * m)
        t_sum, t_sq = t_mats[0], jnp.sum(t_mats[0] * t_mats[0])
        for m in t_mats[1:]:
            t_sum = t_sum + m
            t_sq = t_sq + jnp.sum(m * m)
        pair_sq = t_nl * s_sq + s_nl * t_sq - 2.0 * jnp.sum(s_sum * t_sum)
        g_loss = pair_sq * (1.0 / (t_nl * B * B))

        out_ref[0, 0] = ((l_loss + g_loss) * (1.0 / (s_nl + 1))).astype(out_ref.dtype)

    return kernel


def _loss_from_pooled(s_pool, t_pool, s_l, t_l):
    inputs = list(s_pool) + list(t_pool) + [s_l, t_l]
    vmem = pl.BlockSpec(memory_space=pltpu.MemorySpace.VMEM)
    out = pl.pallas_call(
        _make_loss_kernel(len(s_pool), len(t_pool)),
        out_shape=jax.ShapeDtypeStruct((1, 1), jnp.float32),
        in_specs=[vmem] * len(inputs),
        out_specs=pl.BlockSpec(memory_space=pltpu.MemorySpace.SMEM),
    )(*inputs)
    return out[0, 0]


# -------------------------------- wrapper ------------------------------------

def logit_similarity(s_g_l, t_g_l):
    """Pallas implementation of LogitSimilarity.forward."""
    s_g, s_l = s_g_l
    t_g, t_l = t_g_l
    # Stage 1: stream each feature map (native dtype) through the pooling kernel.
    s_pool = [_pooled_sumsq(f) for f in s_g]
    t_pool = [_pooled_sumsq(f) for f in t_g]
    # Stage 2: tiny fused kernel -> scalar loss.
    return _loss_from_pooled(s_pool, t_pool, s_l, t_l)


# --------------------------- pure-JAX reference ------------------------------

def _ref_sim(f, is_at=True):
    B = f.shape[0]
    if is_at:
        a = jnp.mean(f.astype(jnp.float32) ** 2, axis=1).reshape(B, -1)
        a = a / jnp.maximum(jnp.linalg.norm(a, axis=1, keepdims=True), _EPS)
        f = a
    f = f.reshape(B, -1).astype(jnp.float32)
    f = f / jnp.maximum(jnp.linalg.norm(f, axis=1, keepdims=True), _EPS)
    g = f @ f.T
    return g / jnp.maximum(jnp.linalg.norm(g, axis=1, keepdims=True), _EPS)


def _ref_loss(s_g_l, t_g_l):
    s_g, s_l = s_g_l
    t_g, t_l = t_g_l
    s_nl = len(s_g)
    s_l_mtx = _ref_sim(s_l, is_at=False)
    t_l_mtx = _ref_sim(t_l, is_at=False)
    S = jnp.stack([_ref_sim(f) for f in s_g])
    T = jnp.stack([_ref_sim(f) for f in t_g] + [t_l_mtx])
    l_loss = jnp.mean((s_l_mtx - t_l_mtx) ** 2)
    diff = S[:, None] - T[None, :]
    g_loss = jnp.sum(jnp.mean((diff ** 2).reshape(s_nl, -1), axis=1))
    return (l_loss + g_loss) / (s_nl + 1)


# ---------------------------------- main -------------------------------------

if __name__ == "__main__":
    key = jax.random.PRNGKey(0)
    kkeys = jax.random.split(key, 6)

    B, NUM_CLASSES = 8, 16
    # Student feature maps (NCHW) + student logits.
    s_g = [
        jax.random.normal(kkeys[0], (B, 4, 16, 16), jnp.float32),
        jax.random.normal(kkeys[1], (B, 8, 8, 8), jnp.float32),
    ]
    s_l = jax.random.normal(kkeys[2], (B, NUM_CLASSES), jnp.float32)
    # Teacher feature maps (NCHW) + teacher logits.
    t_g = [
        jax.random.normal(kkeys[3], (B, 6, 16, 16), jnp.float32),
        jax.random.normal(kkeys[4], (B, 12, 8, 8), jnp.float32),
    ]
    t_l = jax.random.normal(kkeys[5], (B, NUM_CLASSES), jnp.float32)

    loss = logit_similarity((s_g, s_l), (t_g, t_l))
    loss = jax.block_until_ready(loss)

    ref = jax.block_until_ready(_ref_loss((s_g, s_l), (t_g, t_l)))
    assert jnp.allclose(loss, ref, rtol=1e-4, atol=1e-5), (loss, ref)

    print("KERNEL_OK")
</pallas_src>

<mosaic_0001>
module attributes {stable_mosaic.version = 11 : i64} {
  func.func @_pool_sumsq_kernel(%arg0: i32, %arg1: i32, %arg2: memref<8x4x256xf32, #tpu.memory_space<vmem>>, %arg3: memref<1x8x256xf32, #tpu.memory_space<vmem>>) attributes {dimension_semantics = [#tpu.dimension_semantics<parallel>, #tpu.dimension_semantics<arbitrary>], iteration_bounds = array<i64: 1, 1>, scalar_prefetch = 0 : i64, scratch_operands = 0 : i64, tpu.core_type = #tpu.core_type<tc>, window_params = [{transform_indices = @transform_0, window_bounds = array<i64: 8, 4, 256>}, {transform_indices = @transform_1, window_bounds = array<i64: 1, 8, 256>}]} {
    %c0 = arith.constant 0 : index
    %c0_0 = arith.constant 0 : index
    %c0_1 = arith.constant 0 : index
    %0 = vector.load %arg2[%c0, %c0_0, %c0_1] : memref<8x4x256xf32, #tpu.memory_space<vmem>>, vector<8x4x256xf32>
    %1 = arith.mulf %0, %0 : vector<8x4x256xf32>
    %cst = arith.constant dense<0.000000e+00> : vector<8x256xf32>
    %2 = vector.multi_reduction <add>, %1, %cst [1] : vector<8x4x256xf32> to vector<8x256xf32>
    %c0_i32 = arith.constant 0 : i32
    %3 = arith.cmpi eq, %arg1, %c0_i32 : i32
    %4 = arith.extui %3 : i1 to i32
    %c0_i32_2 = arith.constant 0 : i32
    %5 = arith.cmpi ne, %4, %c0_i32_2 : i32
    scf.if %5 {
      %c0_5 = arith.constant 0 : index
      %c0_6 = arith.constant 0 : index
      %c0_7 = arith.constant 0 : index
      %9 = vector.load %arg3[%c0_5, %c0_6, %c0_7] : memref<1x8x256xf32, #tpu.memory_space<vmem>>, vector<1x8x256xf32>
      %10 = vector.shape_cast %9 : vector<1x8x256xf32> to vector<8x256xf32>
      %11 = vector.shape_cast %2 : vector<8x256xf32> to vector<1x8x256xf32>
      tpu.vector_store %arg3[%c0_5, %c0_6, %c0_7], %11 {strides = array<i32>} : memref<1x8x256xf32, #tpu.memory_space<vmem>>, vector<1x8x256xf32>,
    } else {
    }
    %c0_i32_3 = arith.constant 0 : i32
    %6 = arith.cmpi sgt, %arg1, %c0_i32_3 : i32
    %7 = arith.extui %6 : i1 to i32
    %c0_i32_4 = arith.constant 0 : i32
    %8 = arith.cmpi ne, %7, %c0_i32_4 : i32
    scf.if %8 {
      %c0_5 = arith.constant 0 : index
      %c0_6 = arith.constant 0 : index
      %c0_7 = arith.constant 0 : index
      %9 = vector.load %arg3[%c0_5, %c0_6, %c0_7] : memref<1x8x256xf32, #tpu.memory_space<vmem>>, vector<1x8x256xf32>
      %10 = vector.shape_cast %9 : vector<1x8x256xf32> to vector<8x256xf32>
      %11 = arith.addf %10, %2 : vector<8x256xf32>
      %c0_8 = arith.constant 0 : index
      %c0_9 = arith.constant 0 : index
      %c0_10 = arith.constant 0 : index
      %12 = vector.load %arg3[%c0_8, %c0_9, %c0_10] : memref<1x8x256xf32, #tpu.memory_space<vmem>>, vector<1x8x256xf32>
      %13 = vector.shape_cast %12 : vector<1x8x256xf32> to vector<8x256xf32>
      %14 = vector.shape_cast %11 : vector<8x256xf32> to vector<1x8x256xf32>
      tpu.vector_store %arg3[%c0_8, %c0_9, %c0_10], %14 {strides = array<i32>} : memref<1x8x256xf32, #tpu.memory_space<vmem>>, vector<1x8x256xf32>,
    } else {
    }
    return
  }
  func.func @transform_0(%arg0: i32, %arg1: i32) -> (i32, i32, i32) {
    %c1_i32 = arith.constant 1 : i32
    %0 = arith.muli %arg0, %c1_i32 : i32
    %1 = arith.addi %0, %arg1 : i32
    %c0_i32 = arith.constant 0 : i32
    %c0_i32_0 = arith.constant 0 : i32
    %c0_i32_1 = arith.constant 0 : i32
    return %c0_i32, %1, %c0_i32_0 : i32, i32, i32
  }
  func.func @transform_1(%arg0: i32, %arg1: i32) -> (i32, i32, i32) {
    %c0_i32 = arith.constant 0 : i32
    %c0_i32_0 = arith.constant 0 : i32
    %c0_i32_1 = arith.constant 0 : i32
    return %arg0, %c0_i32, %c0_i32_0 : i32, i32, i32
  }
}

</mosaic_0001>

<llo_original>
// kernel: tpu_custom_call.1
$region0: #{tpu_custom_call.1}
  #allocation0 [shape = 'u32[]', space=smem, size = 0x4, offset = 0x4, fixed_abs, tag = 'smem constant byte address 0x4 - core index']
  #allocation1 [shape = 'u32[72,128]{1,0:T(1,128)}', space=vmem, size = 0x9000, scoped, tag = 'internal scratch']
  %s0 = inlined_call_operand.hbm [shape: f32[8,4,256], index: 0, kind: input, shape index: {}]
  %s1 = inlined_call_operand.hbm [shape: f32[1,8,256], index: 1, kind: output, shape index: {}]
  %s2 = sld [smem:[#allocation0]]
  $region26: #{tpu_custom_call.1} parent=0
    _
  %s4 = ssub.s32 1, %s2
  %s5 = scalar_select 0, %s4, %s2
  $region1: #{tpu_custom_call.1} parent=0
    #allocation2 [shape = 'u8[32768]{0}', space=vmem, size = 0x8000, scoped, tag = 'input window, operand 0, single buffered']
    #allocation3 [shape = 's32[1]{0}', space=sflag, size = 0x4, scoped, tag = 'scoped memory for tpu_custom_call.1']
    #allocation4 [shape = 's32[1]{0}', space=sflag, size = 0x4, scoped, tag = 'scoped memory for tpu_custom_call.1']
    #allocation5 [shape = 'u8[8192]{0}', space=vmem, size = 0x2000, scoped, tag = 'output window, operand 0, single buffered']
    %6 = vsyncpa [#allocation3], 0
    %7 = vsyncpa [#allocation4], 0
    // Predicated region
    $region2: #{tpu_custom_call.1} parent=1 // pred_check
      _
    $region3: #{tpu_custom_call.1} parent=1 // pred_check_branch
      %9 = sbr.rel (0) target = $region5
    $region4: #{tpu_custom_call.1} parent=1 // pred_region
      %s10 = sadd.s32 0, 0
      %12 = vsyncadd [#allocation3], 0
      %s13 = smul.addr %s10, 2
      %s14 = smul.addr %s13, 4
      %s15 = scalar_lea.hbm %s0, %s14
      %s16 = sshll.u32 %s15, 4
      %s17 = int_to_ptr.hbm [resolvable:$true] %s16
      %s18 = sshll.u32 [#allocation2], 4
      %s19 = int_to_ptr.vmem [resolvable:$true] %s18
      %24 = dma.hbm_to_vmem [thread:$0]  %s17, 1024, %s19, [#allocation3], 128, 128, 8
    $region5: #{tpu_custom_call.1} parent=1 // pred_fallthru
      _
    // Predicated region
    $region6: #{tpu_custom_call.1} parent=1 // pred_check
      _
    $region7: #{tpu_custom_call.1} parent=1 // pred_check_branch
      %26 = sbr.rel (0) target = $region9
    $region8: #{tpu_custom_call.1} parent=1 // pred_region
      %28 = dma.done [#allocation3], 1024
    $region9: #{tpu_custom_call.1} parent=1 // pred_fallthru
      _
    %s29 = sadd.s32 0, 0
    %v30 = vld [vmem:[#allocation2] sm:$0xff]
    %v31 = vld [vmem:[#allocation2 + $0x8] sm:$0xff]
    %v32 = vld [vmem:[#allocation2 + $0x10] sm:$0xff]
    %v33 = vld [vmem:[#allocation2 + $0x18] sm:$0xff]
    %v34 = vld [vmem:[#allocation2 + $0x20] sm:$0xff]
    %v35 = vld [vmem:[#allocation2 + $0x28] sm:$0xff]
    %v36 = vld [vmem:[#allocation2 + $0x30] sm:$0xff]
    %v37 = vld [vmem:[#allocation2 + $0x38] sm:$0xff]
    %v38 = vmul.f32 %v30, %v30
    %v39 = vmul.f32 %v31, %v31
    %v40 = vmul.f32 %v32, %v32
    %v41 = vmul.f32 %v33, %v33
    %v42 = vmul.f32 %v34, %v34
    %v43 = vmul.f32 %v35, %v35
    %v44 = vmul.f32 %v36, %v36
    %v45 = vmul.f32 %v37, %v37
    %54 = vst [vmem:[#allocation1] ss:$2 sm:$0xff] %v38
    %v55 = vld.sshfl [vmem:[#allocation1] sm:$0xff pattern:$0x75316420]
    %v56 = vld.sshfl [vmem:[#allocation1 + $0x8] sm:$0xff pattern:$0x75316420]
    %s57 = scalar_lea.vmem [#allocation1], 16
    %58 = vst [vmem:[%s57] ss:$2 sm:$0xff] %v39
    %v59 = vld.sshfl [vmem:[#allocation1 + $0x10] sm:$0xff pattern:$0x75316420]
    %v60 = vld.sshfl [vmem:[#allocation1 + $0x18] sm:$0xff pattern:$0x75316420]
    %s61 = scalar_lea.vmem [#allocation1], 32
    %62 = vst [vmem:[%s61] ss:$2 sm:$0xff] %v40
    %v63 = vld.sshfl [vmem:[#allocation1 + $0x20] sm:$0xff pattern:$0x75316420]
    %v64 = vld.sshfl [vmem:[#allocation1 + $0x28] sm:$0xff pattern:$0x75316420]
    %s65 = scalar_lea.vmem [#allocation1], 48
    %66 = vst [vmem:[%s65] ss:$2 sm:$0xff] %v41
    %v67 = vld.sshfl [vmem:[#allocation1 + $0x30] sm:$0xff pattern:$0x75316420]
    %v68 = vld.sshfl [vmem:[#allocation1 + $0x38] sm:$0xff pattern:$0x75316420]
    %69 = vst [vmem:[#allocation1] ss:$2 sm:$0xff] %v42
    %v70 = vld.sshfl [vmem:[#allocation1] sm:$0xff pattern:$0x75316420]
    %v71 = vld.sshfl [vmem:[#allocation1 + $0x8] sm:$0xff pattern:$0x75316420]
    %72 = vst [vmem:[%s57] ss:$2 sm:$0xff] %v43
    %v73 = vld.sshfl [vmem:[#allocation1 + $0x10] sm:$0xff pattern:$0x75316420]
    %v74 = vld.sshfl [vmem:[#allocation1 + $0x18] sm:$0xff pattern:$0x75316420]
    %75 = vst [vmem:[%s61] ss:$2 sm:$0xff] %v44
    %v76 = vld.sshfl [vmem:[#allocation1 + $0x20] sm:$0xff pattern:$0x75316420]
    %v77 = vld.sshfl [vmem:[#allocation1 + $0x28] sm:$0xff pattern:$0x75316420]
    %78 = vst [vmem:[%s65] ss:$2 sm:$0xff] %v45
    %v79 = vld.sshfl [vmem:[#allocation1 + $0x30] sm:$0xff pattern:$0x75316420]
    %v80 = vld.sshfl [vmem:[#allocation1 + $0x38] sm:$0xff pattern:$0x75316420]
    %vm97 = vcmask 1043456
    %v98 = vsel %vm97, %v55, 0.0
    %v99 = vrot.slane %v98, 4
    %v100 = vadd.f32 %v98, %v99
    %v101 = vrot.slane %v100, 2
    %v102 = vadd.f32 %v100, %v101
    %v103 = vrot.slane %v102, 1
    %v104 = vadd.f32 %v102, %v103
    %v105 = vsel %vm97, %v56, 0.0
    %v106 = vrot.slane %v105, 4
    %v107 = vadd.f32 %v105, %v106
    %v108 = vrot.slane %v107, 2
    %v109 = vadd.f32 %v107, %v108
    %v110 = vrot.slane %v109, 1
    %v111 = vadd.f32 %v109, %v110
    %v112 = vsel %vm97, %v59, 0.0
    %v113 = vrot.slane %v112, 4
    %v114 = vadd.f32 %v112, %v113
    %v115 = vrot.slane %v114, 2
    %v116 = vadd.f32 %v114, %v115
    %v117 = vrot.slane %v116, 1
    %v118 = vadd.f32 %v116, %v117
    %v119 = vsel %vm97, %v60, 0.0
    %v120 = vrot.slane %v119, 4
    %v121 = vadd.f32 %v119, %v120
    %v122 = vrot.slane %v121, 2
    %v123 = vadd.f32 %v121, %v122
    %v124 = vrot.slane %v123, 1
    %v125 = vadd.f32 %v123, %v124
    %v126 = vsel %vm97, %v63, 0.0
    %v127 = vrot.slane %v126, 4
    %v128 = vadd.f32 %v126, %v127
    %v129 = vrot.slane %v128, 2
    %v130 = vadd.f32 %v128, %v129
    %v131 = vrot.slane %v130, 1
    %v132 = vadd.f32 %v130, %v131
    %v133 = vsel %vm97, %v64, 0.0
    %v134 = vrot.slane %v133, 4
    %v135 = vadd.f32 %v133, %v134
    %v136 = vrot.slane %v135, 2
    %v137 = vadd.f32 %v135, %v136
    %v138 = vrot.slane %v137, 1
    %v139 = vadd.f32 %v137, %v138
    %v140 = vsel %vm97, %v67, 0.0
    %v141 = vrot.slane %v140, 4
    %v142 = vadd.f32 %v140, %v141
    %v143 = vrot.slane %v142, 2
    %v144 = vadd.f32 %v142, %v143
    %v145 = vrot.slane %v144, 1
    %v146 = vadd.f32 %v144, %v145
    %v147 = vsel %vm97, %v68, 0.0
    %v148 = vrot.slane %v147, 4
    %v149 = vadd.f32 %v147, %v148
    %v150 = vrot.slane %v149, 2
    %v151 = vadd.f32 %v149, %v150
    %v152 = vrot.slane %v151, 1
    %v153 = vadd.f32 %v151, %v152
    %v154 = vsel %vm97, %v70, 0.0
    %v155 = vrot.slane %v154, 4
    %v156 = vadd.f32 %v154, %v155
    %v157 = vrot.slane %v156, 2
    %v158 = vadd.f32 %v156, %v157
    %v159 = vrot.slane %v158, 1
    %v160 = vadd.f32 %v158, %v159
    %v161 = vsel %vm97, %v71, 0.0
    %v162 = vrot.slane %v161, 4
    %v163 = vadd.f32 %v161, %v162
    %v164 = vrot.slane %v163, 2
    %v165 = vadd.f32 %v163, %v164
    %v166 = vrot.slane %v165, 1
    %v167 = vadd.f32 %v165, %v166
    %v168 = vsel %vm97, %v73, 0.0
    %v169 = vrot.slane %v168, 4
    %v170 = vadd.f32 %v168, %v169
    %v171 = vrot.slane %v170, 2
    %v172 = vadd.f32 %v170, %v171
    %v173 = vrot.slane %v172, 1
    %v174 = vadd.f32 %v172, %v173
    %v175 = vsel %vm97, %v74, 0.0
    %v176 = vrot.slane %v175, 4
    %v177 = vadd.f32 %v175, %v176
    %v178 = vrot.slane %v177, 2
    %v179 = vadd.f32 %v177, %v178
    %v180 = vrot.slane %v179, 1
    %v181 = vadd.f32 %v179, %v180
    %v182 = vsel %vm97, %v76, 0.0
    %v183 = vrot.slane %v182, 4
    %v184 = vadd.f32 %v182, %v183
    %v185 = vrot.slane %v184, 2
    %v186 = vadd.f32 %v184, %v185
    %v187 = vrot.slane %v186, 1
    %v188 = vadd.f32 %v186, %v187
    %v189 = vsel %vm97, %v77, 0.0
    %v190 = vrot.slane %v189, 4
    %v191 = vadd.f32 %v189, %v190
    %v192 = vrot.slane %v191, 2
    %v193 = vadd.f32 %v191, %v192
    %v194 = vrot.slane %v193, 1
    %v195 = vadd.f32 %v193, %v194
    %v196 = vsel %vm97, %v79, 0.0
    %v197 = vrot.slane %v196, 4
    %v198 = vadd.f32 %v196, %v197
    %v199 = vrot.slane %v198, 2
    %v200 = vadd.f32 %v198, %v199
    %v201 = vrot.slane %v200, 1
    %v202 = vadd.f32 %v200, %v201
    %v203 = vsel %vm97, %v80, 0.0
    %v204 = vrot.slane %v203, 4
    %v205 = vadd.f32 %v203, %v204
    %v206 = vrot.slane %v205, 2
    %v207 = vadd.f32 %v205, %v206
    %v208 = vrot.slane %v207, 1
    %v209 = vadd.f32 %v207, %v208
    %p210 = scmp.eq.s32.totalorder 0, 0
    // Predicated region
    $region10: #{tpu_custom_call.1} parent=1 // pred_check
      %p211 = pneg %p210
    $region11: #{tpu_custom_call.1} parent=1 // pred_check_branch
      %213 = sbr.rel (%p211) target = $region13
    $region12: #{tpu_custom_call.1} parent=1 // pred_region
      %vm230 = vcmask 1041409
      %v231 = vsel %vm230, %v118, %v104
      %vm232 = vcmask 1042434
      %v233 = vsel %vm232, %v132, %v231
      %vm234 = vcmask 1043459
      %v235 = vsel %vm234, %v146, %v233
      %vm236 = vcmask 1044484
      %v237 = vsel %vm236, %v160, %v235
      %vm238 = vcmask 1045509
      %v239 = vsel %vm238, %v174, %v237
      %vm240 = vcmask 1046534
      %v241 = vsel %vm240, %v188, %v239
      %vm242 = vcmask 1047559
      %v243 = vsel %vm242, %v202, %v241
      %v244 = vsel %vm230, %v125, %v111
      %v245 = vsel %vm232, %v139, %v244
      %v246 = vsel %vm234, %v153, %v245
      %v247 = vsel %vm236, %v167, %v246
      %v248 = vsel %vm238, %v181, %v247
      %v249 = vsel %vm240, %v195, %v248
      %v250 = vsel %vm242, %v209, %v249
      %253 = vst [vmem:[#allocation5] sm:$0xff] %v243
      %254 = vst [vmem:[#allocation5 + $0x8] sm:$0xff] %v250
    $region13: #{tpu_custom_call.1} parent=1 // pred_fallthru
      _
    %p255 = scmp.gt.s32.totalorder 0, 0
    // Predicated region
    $region14: #{tpu_custom_call.1} parent=1 // pred_check
      %p256 = pneg %p255
    $region15: #{tpu_custom_call.1} parent=1 // pred_check_branch
      %258 = sbr.rel (%p256) target = $region17
    $region16: #{tpu_custom_call.1} parent=1 // pred_region
      %v259 = vld [vmem:[#allocation5] sm:$0xff]
      %v260 = vld [vmem:[#allocation5 + $0x8] sm:$0xff]
      %vm277 = vcmask 1041409
      %v278 = vsel %vm277, %v118, %v104
      %vm279 = vcmask 1042434
      %v280 = vsel %vm279, %v132, %v278
      %vm281 = vcmask 1043459
      %v282 = vsel %vm281, %v146, %v280
      %vm283 = vcmask 1044484
      %v284 = vsel %vm283, %v160, %v282
      %vm285 = vcmask 1045509
      %v286 = vsel %vm285, %v174, %v284
      %vm287 = vcmask 1046534
      %v288 = vsel %vm287, %v188, %v286
      %vm289 = vcmask 1047559
      %v290 = vsel %vm289, %v202, %v288
      %v291 = vsel %vm277, %v125, %v111
      %v292 = vsel %vm279, %v139, %v291
      %v293 = vsel %vm281, %v153, %v292
      %v294 = vsel %vm283, %v167, %v293
      %v295 = vsel %vm285, %v181, %v294
      %v296 = vsel %vm287, %v195, %v295
      %v297 = vsel %vm289, %v209, %v296
      %v300 = vadd.f32 %v259, %v290
      %v301 = vadd.f32 %v260, %v297
      %302 = vst [vmem:[#allocation5] sm:$0xff] %v300
      %303 = vst [vmem:[#allocation5 + $0x8] sm:$0xff] %v301
    $region17: #{tpu_custom_call.1} parent=1 // pred_fallthru
      _
    // Predicated region
    $region18: #{tpu_custom_call.1} parent=1 // pred_check
      _
    $region19: #{tpu_custom_call.1} parent=1 // pred_check_branch
      %305 = sbr.rel (0) target = $region21
    $region20: #{tpu_custom_call.1} parent=1 // pred_region
      %307 = vsyncadd [#allocation4], 0
      %s309 = sshll.u32 [#allocation5], 4
      %s310 = int_to_ptr.vmem [resolvable:$true] %s309
      %s311 = sshll.u32 %s1, 4
      %s312 = int_to_ptr.hbm [resolvable:$true] %s311
      %314 = dma.vmem_to_hbm [thread:$0]  %s310, 256, %s312, [#allocation4]
    $region21: #{tpu_custom_call.1} parent=1 // pred_fallthru
      _
    // Predicated region
    $region22: #{tpu_custom_call.1} parent=1 // pred_check
      _
    $region23: #{tpu_custom_call.1} parent=1 // pred_check_branch
      %316 = sbr.rel (0) target = $region25
    $region24: #{tpu_custom_call.1} parent=1 // pred_region
      %318 = dma.done [#allocation4], 256
    $region25: #{tpu_custom_call.1} parent=1 // pred_fallthru
      _
    %319 = vsyncpa [#allocation3], 1
    %320 = vsyncpa [#allocation4], 1

</llo_original>
